<compile_context>
chip_gen: v6e
topology: v6e:2x2x1
jax: 0.10.0
libtpu: 0.0.40
codegen_flags: <defaults>
</compile_context>

<pallas_src>
import functools

import jax
import jax.numpy as jnp
from jax.experimental import pallas as pl
from jax.experimental.pallas import tpu as pltpu


def _round_up(x, m):
    return (x + m - 1) // m * m


def protocbm_kernel(patch_ref, wc_ref, bc_ref, wp_ref, bp_ref, wh_ref, bh_ref,
                    c_out_ref, y_out_ref, acc_ref, *,
                    valid_rows, tile_rows, needs_mask):
    """One (batch, spatial-tile) grid step of the fused ProtoCBM forward.

    patch_ref : [1, TS, K9]  bf16 im2col patches for this batch / spatial tile
    wc_ref    : [K9, FP]     bf16 fused conv3x3 weight (9 taps stacked along K)
    bc_ref    : [1, FP]      f32  conv bias
    wp_ref    : [FP, CP]     f32  projector weight (GAP 1/(H*W) scale folded in)
    bp_ref    : [1, CP]      f32  projector bias
    wh_ref    : [CP, PP]     f32  head weight (padded rows are zero)
    bh_ref    : [1, PP]      f32  head bias
    c_out_ref : [1, 1, CP]   f32  concept logits (written on last spatial step)
    y_out_ref : [1, 1, PP]   f32  target logits  (written on last spatial step)
    acc_ref   : [8, FP]      f32  running partial spatial sums of ReLU(conv) features
    """
    s = pl.program_id(1)

    @pl.when(s == 0)
    def _init():
        acc_ref[...] = jnp.zeros_like(acc_ref)

    # Single im2col matmul (bf16 operands, f32 accumulation) + bias + ReLU.
    patch = patch_ref[0]                                               # [TS, K9]
    h = jnp.dot(patch, wc_ref[...], preferred_element_type=jnp.float32)
    h = jnp.maximum(h + bc_ref[...], 0.0)                              # [TS, FP]

    if needs_mask:
        # Ragged last tile: zero out rows past the true spatial extent so the
        # ReLU'd conv bias of padded rows cannot corrupt the GAP sum.
        row = jax.lax.broadcasted_iota(jnp.int32, (tile_rows, 1), 0) + s * tile_rows
        h = jnp.where(row < valid_rows, h, 0.0)

    # Partial GAP: fold TS rows into 8 sublane-partial sums with pure VPU adds.
    acc_ref[...] += jnp.sum(h.reshape(tile_rows // 8, 8, -1), axis=0)

    @pl.when(s == pl.num_programs(1) - 1)
    def _finalize():
        feat = jnp.sum(acc_ref[...], axis=0, keepdims=True)            # [1, FP] spatial sum
        # Projector (GAP mean already folded into wp) -> concept logits.
        c_logits = jnp.dot(feat, wp_ref[...],
                           preferred_element_type=jnp.float32) + bp_ref[...]
        c_out_ref[...] = c_logits.reshape(1, 1, -1)
        # act_c = Sigmoid, then linear head on concept probabilities.
        # Padded concept lanes give sigmoid(0)=0.5 but hit zero rows of wh -> no effect.
        c_probs = jax.nn.sigmoid(c_logits)
        y_logits = jnp.dot(c_probs, wh_ref[...],
                           preferred_element_type=jnp.float32) + bh_ref[...]
        y_out_ref[...] = y_logits.reshape(1, 1, -1)


def _im2col_patches(x_nchw):
    """NCHW -> [B, H*W, 9*Cin] patches for a 3x3 / stride-1 / pad-1 conv."""
    B, Cin, H, W = x_nchw.shape
    x = jnp.transpose(x_nchw, (0, 2, 3, 1)).astype(jnp.float32)        # NHWC
    xp = jnp.pad(x, ((0, 0), (1, 1), (1, 1), (0, 0)))
    taps = [xp[:, kh:kh + H, kw:kw + W, :] for kh in range(3) for kw in range(3)]
    return jnp.concatenate(taps, axis=-1).reshape(B, H * W, 9 * Cin)


def protocbm_forward(x_nchw, params, c_true=None, *, spatial_tile=512):
    """Returns (c_pred_logits, min_distances, proto_presence, y_pred_logits)."""
    assert spatial_tile % 8 == 0
    B, Cin, H, W = x_nchw.shape
    S = H * W
    K9 = 9 * Cin
    F = params["wc"].shape[-1]
    C = params["wp"].shape[-1]
    P = params["wh"].shape[-1]

    # Lane-dense padded dims for features / concepts / classes (multiples of 128).
    # The patch K dim is deliberately left at its natural 9*Cin size (full-dim block).
    FP = _round_up(F, 128)
    CP = _round_up(C, 128)
    PP = _round_up(P, 128)

    # Spatial tiling: fixed tile, ragged last tile handled by an in-kernel row mask.
    TS = _round_up(S, 8) if S <= spatial_tile else spatial_tile
    S_pad = _round_up(S, TS)
    needs_mask = (S_pad != S)
    n_tiles = S_pad // TS

    # --- wrapper-side layout plumbing: im2col + padding + dtype casts ---
    patches = _im2col_patches(x_nchw)                                  # [B, S, 9*Cin]
    if needs_mask:
        patches = jnp.pad(patches, ((0, 0), (0, S_pad - S), (0, 0)))
    patches = patches.astype(jnp.bfloat16)

    wc2d = jnp.pad(params["wc"].reshape(K9, F),
                   ((0, 0), (0, FP - F))).astype(jnp.bfloat16)
    bc = jnp.pad(params["bc"].reshape(1, F), ((0, 0), (0, FP - F))).astype(jnp.float32)
    wp = jnp.pad(params["wp"] * (1.0 / S),                             # fold GAP mean scale
                 ((0, FP - F), (0, CP - C))).astype(jnp.float32)
    bp = jnp.pad(params["bp"].reshape(1, C), ((0, 0), (0, CP - C))).astype(jnp.float32)
    wh = jnp.pad(params["wh"], ((0, CP - C), (0, PP - P))).astype(jnp.float32)
    bh = jnp.pad(params["bh"].reshape(1, P), ((0, 0), (0, PP - P))).astype(jnp.float32)

    kernel = functools.partial(protocbm_kernel,
                               valid_rows=S, tile_rows=TS, needs_mask=needs_mask)

    grid = (B, n_tiles)
    c_pad, y_pad = pl.pallas_call(
        kernel,
        out_shape=(jax.ShapeDtypeStruct((B, 1, CP), jnp.float32),
                   jax.ShapeDtypeStruct((B, 1, PP), jnp.float32)),
        grid_spec=pltpu.PrefetchScalarGridSpec(
            num_scalar_prefetch=0,
            grid=grid,
            in_specs=[
                pl.BlockSpec((1, TS, K9), lambda b, s: (b, s, 0)),     # patches (pipelined)
                # Constant-index weight/bias blocks: re-fetched only once (index map is
                # constant), kept resident in VMEM across the whole grid.
                pl.BlockSpec((K9, FP), lambda b, s: (0, 0)),           # wc
                pl.BlockSpec((1, FP), lambda b, s: (0, 0)),            # bc
                pl.BlockSpec((FP, CP), lambda b, s: (0, 0)),           # wp
                pl.BlockSpec((1, CP), lambda b, s: (0, 0)),            # bp
                pl.BlockSpec((CP, PP), lambda b, s: (0, 0)),           # wh
                pl.BlockSpec((1, PP), lambda b, s: (0, 0)),            # bh
            ],
            out_specs=[
                pl.BlockSpec((1, 1, CP), lambda b, s: (b, 0, 0)),
                pl.BlockSpec((1, 1, PP), lambda b, s: (b, 0, 0)),
            ],
            scratch_shapes=[pltpu.VMEM((8, FP), jnp.float32)],
        ),
        compiler_params=pltpu.CompilerParams(
            dimension_semantics=("parallel", "arbitrary"),
            vmem_limit_bytes=48 * 1024 * 1024,   # > v5e/v6e defaults, < v7x's 64 MiB/TC
        ),
    )(patches, wc2d, bc, wp, bp, wh, bh)

    c_logits = c_pad[:, 0, :C]
    y_logits = y_pad[:, 0, :P]

    if c_true is not None:
        assert c_true.shape == c_logits.shape   # c_pred_probs has the same shape
    min_distances = None                        # SequentialModified returns (out, None, None)
    proto_presence = None
    return c_logits, min_distances, proto_presence, y_logits


def _reference(x_nchw, params):
    """Plain-JAX reference with matching numerics (bf16 conv operands, f32 accum)."""
    B, Cin, H, W = x_nchw.shape
    F = params["wc"].shape[-1]
    patches = _im2col_patches(x_nchw)                                  # [B, S, 9*Cin]
    wc2d = params["wc"].reshape(9 * Cin, F)
    h = jnp.einsum("bsk,kf->bsf",
                   patches.astype(jnp.bfloat16), wc2d.astype(jnp.bfloat16),
                   preferred_element_type=jnp.float32)
    h = jnp.maximum(h + params["bc"].reshape(1, 1, F), 0.0)
    feat = h.mean(axis=1)                                              # global average pool
    c_logits = feat @ params["wp"] + params["bp"].reshape(1, -1)
    y_logits = jax.nn.sigmoid(c_logits) @ params["wh"] + params["bh"].reshape(1, -1)
    return c_logits, y_logits


if __name__ == "__main__":
    # Small, module-consistent shapes:
    #   batch=2, in-channels=4, spatial=16x16, backbone features=32,
    #   num_concepts=8, num_classes=3 -> pred_dim=3 ('linear' head)
    B, Cin, H, W = 2, 4, 16, 16
    F, NUM_CONCEPTS, NUM_CLASSES = 32, 8, 3
    PRED_DIM = 1 if NUM_CLASSES == 2 else NUM_CLASSES

    key = jax.random.PRNGKey(0)
    kx, kwc, kbc, kwp, kbp, kwh, kbh, kc = jax.random.split(key, 8)

    x = jax.random.normal(kx, (B, Cin, H, W), jnp.float32)             # NCHW, like PyTorch
    c_true = (jax.random.uniform(kc, (B, NUM_CONCEPTS)) > 0.5).astype(jnp.float32)

    params = {
        "wc": jax.random.normal(kwc, (9, Cin, F), jnp.float32) * 0.1,
        "bc": jax.random.normal(kbc, (1, F), jnp.float32) * 0.01,
        "wp": jax.random.normal(kwp, (F, NUM_CONCEPTS), jnp.float32) * 0.1,
        "bp": jax.random.normal(kbp, (1, NUM_CONCEPTS), jnp.float32) * 0.01,
        "wh": jax.random.normal(kwh, (NUM_CONCEPTS, PRED_DIM), jnp.float32) * 0.1,
        "bh": jax.random.normal(kbh, (1, PRED_DIM), jnp.float32) * 0.01,
    }

    c_logits, min_d, proto_p, y_logits = protocbm_forward(x, params, c_true=c_true)
    jax.block_until_ready((c_logits, y_logits))

    ref_c, ref_y = _reference(x, params)
    assert c_logits.shape == (B, NUM_CONCEPTS)
    assert y_logits.shape == (B, PRED_DIM)
    assert min_d is None and proto_p is None
    assert jnp.allclose(c_logits, ref_c, atol=2e-3, rtol=2e-3), (
        float(jnp.max(jnp.abs(c_logits - ref_c))))
    assert jnp.allclose(y_logits, ref_y, atol=2e-3, rtol=2e-3), (
        float(jnp.max(jnp.abs(y_logits - ref_y))))

    print("KERNEL_OK")
</pallas_src>

<mosaic_0001>
module attributes {stable_mosaic.version = 11 : i64} {
  func.func @protocbm_kernel(%arg0: i32, %arg1: i32, %arg2: memref<1x256x36xbf16, #tpu.memory_space<vmem>>, %arg3: memref<36x128xbf16, #tpu.memory_space<vmem>>, %arg4: memref<1x128xf32, #tpu.memory_space<vmem>>, %arg5: memref<128x128xf32, #tpu.memory_space<vmem>>, %arg6: memref<1x128xf32, #tpu.memory_space<vmem>>, %arg7: memref<128x128xf32, #tpu.memory_space<vmem>>, %arg8: memref<1x128xf32, #tpu.memory_space<vmem>>, %arg9: memref<1x1x128xf32, #tpu.memory_space<vmem>>, %arg10: memref<1x1x128xf32, #tpu.memory_space<vmem>>, %arg11: memref<8x128xf32, #tpu.memory_space<vmem>>) attributes {dimension_semantics = [#tpu.dimension_semantics<parallel>, #tpu.dimension_semantics<arbitrary>], iteration_bounds = array<i64: 2, 1>, scalar_prefetch = 0 : i64, scratch_operands = 1 : i64, tpu.core_type = #tpu.core_type<tc>, window_params = [{transform_indices = @transform_0, window_bounds = array<i64: 1, 256, 36>}, {pipeline_mode = #tpu.pipeline_mode<synchronous>, transform_indices = @transform_1, window_bounds = array<i64: 36, 128>}, {pipeline_mode = #tpu.pipeline_mode<synchronous>, transform_indices = @transform_2, window_bounds = array<i64: 1, 128>}, {pipeline_mode = #tpu.pipeline_mode<synchronous>, transform_indices = @transform_3, window_bounds = array<i64: 128, 128>}, {pipeline_mode = #tpu.pipeline_mode<synchronous>, transform_indices = @transform_4, window_bounds = array<i64: 1, 128>}, {pipeline_mode = #tpu.pipeline_mode<synchronous>, transform_indices = @transform_5, window_bounds = array<i64: 128, 128>}, {pipeline_mode = #tpu.pipeline_mode<synchronous>, transform_indices = @transform_6, window_bounds = array<i64: 1, 128>}, {transform_indices = @transform_7, window_bounds = array<i64: 1, 1, 128>}, {transform_indices = @transform_8, window_bounds = array<i64: 1, 1, 128>}]} {
    %c0_i32 = arith.constant 0 : i32
    %0 = arith.cmpi eq, %arg1, %c0_i32 : i32
    %1 = arith.extui %0 : i1 to i32
    %c0_i32_0 = arith.constant 0 : i32
    %2 = arith.cmpi ne, %1, %c0_i32_0 : i32
    scf.if %2 {
      %cst_15 = arith.constant 0.000000e+00 : f32
      %20 = vector.broadcast %cst_15 : f32 to vector<8x128xf32>
      %c0_16 = arith.constant 0 : index
      %c0_17 = arith.constant 0 : index
      %21 = vector.load %arg11[%c0_16, %c0_17] : memref<8x128xf32, #tpu.memory_space<vmem>>, vector<8x128xf32>
      tpu.vector_store %arg11[%c0_16, %c0_17], %20 {strides = array<i32>} : memref<8x128xf32, #tpu.memory_space<vmem>>, vector<8x128xf32>,
    } else {
    }
    %c0 = arith.constant 0 : index
    %c0_1 = arith.constant 0 : index
    %c0_2 = arith.constant 0 : index
    %3 = vector.load %arg2[%c0, %c0_1, %c0_2] : memref<1x256x36xbf16, #tpu.memory_space<vmem>>, vector<1x256x36xbf16>
    %4 = vector.shape_cast %3 : vector<1x256x36xbf16> to vector<256x36xbf16>
    %c0_3 = arith.constant 0 : index
    %c0_4 = arith.constant 0 : index
    %5 = vector.load %arg3[%c0_3, %c0_4] : memref<36x128xbf16, #tpu.memory_space<vmem>>, vector<36x128xbf16>
    %cst = arith.constant dense<0.000000e+00> : vector<256x128xf32>
    %6 = tpu.matmul %4, %5, %cst {dimension_numbers = #tpu.dot_dimension_numbers<[1], [0], [0], [1], [0, 0, 1, 1], [], []>} : vector<256x36xbf16>, vector<36x128xbf16>, vector<256x128xf32> -> vector<256x128xf32>
    %c0_5 = arith.constant 0 : index
    %c0_6 = arith.constant 0 : index
    %7 = vector.load %arg4[%c0_5, %c0_6] : memref<1x128xf32, #tpu.memory_space<vmem>>, vector<1x128xf32>
    %8 = vector.broadcast %7 : vector<1x128xf32> to vector<256x128xf32>
    %9 = arith.addf %6, %8 : vector<256x128xf32>
    %cst_7 = arith.constant 0.000000e+00 : f32
    %10 = vector.broadcast %cst_7 : f32 to vector<256x128xf32>
    %11 = arith.maximumf %9, %10 : vector<256x128xf32>
    %c0_8 = arith.constant 0 : index
    %c0_9 = arith.constant 0 : index
    %12 = vector.load %arg11[%c0_8, %c0_9] : memref<8x128xf32, #tpu.memory_space<vmem>>, vector<8x128xf32>
    %13 = vector.shape_cast %11 : vector<256x128xf32> to vector<32x8x128xf32>
    %cst_10 = arith.constant dense<0.000000e+00> : vector<8x128xf32>
    %14 = vector.multi_reduction <add>, %13, %cst_10 [0] : vector<32x8x128xf32> to vector<8x128xf32>
    %15 = arith.addf %12, %14 : vector<8x128xf32>
    %c0_11 = arith.constant 0 : index
    %c0_12 = arith.constant 0 : index
    %16 = vector.load %arg11[%c0_11, %c0_12] : memref<8x128xf32, #tpu.memory_space<vmem>>, vector<8x128xf32>
    tpu.vector_store %arg11[%c0_11, %c0_12], %15 {strides = array<i32>} : memref<8x128xf32, #tpu.memory_space<vmem>>, vector<8x128xf32>,
    %c0_i32_13 = arith.constant 0 : i32
    %17 = arith.cmpi eq, %arg1, %c0_i32_13 : i32
    %18 = arith.extui %17 : i1 to i32
    %c0_i32_14 = arith.constant 0 : i32
    %19 = arith.cmpi ne, %18, %c0_i32_14 : i32
    scf.if %19 {
      %c0_15 = arith.constant 0 : index
      %c0_16 = arith.constant 0 : index
      %20 = vector.load %arg11[%c0_15, %c0_16] : memref<8x128xf32, #tpu.memory_space<vmem>>, vector<8x128xf32>
      %cst_17 = arith.constant dense<0.000000e+00> : vector<128xf32>
      %21 = vector.multi_reduction <add>, %20, %cst_17 [0] : vector<8x128xf32> to vector<128xf32>
      %22 = vector.shape_cast %21 : vector<128xf32> to vector<1x128xf32>
      %c0_18 = arith.constant 0 : index
      %c0_19 = arith.constant 0 : index
      %23 = vector.load %arg5[%c0_18, %c0_19] : memref<128x128xf32, #tpu.memory_space<vmem>>, vector<128x128xf32>
      %cst_20 = arith.constant dense<0.000000e+00> : vector<1x128xf32>
      %24 = tpu.matmul %22, %23, %cst_20 {dimension_numbers = #tpu.dot_dimension_numbers<[1], [0], [0], [1], [0, 0, 1, 1], [], []>} : vector<1x128xf32>, vector<128x128xf32>, vector<1x128xf32> -> vector<1x128xf32>
      %c0_21 = arith.constant 0 : index
      %c0_22 = arith.constant 0 : index
      %25 = vector.load %arg6[%c0_21, %c0_22] : memref<1x128xf32, #tpu.memory_space<vmem>>, vector<1x128xf32>
      %26 = arith.addf %24, %25 : vector<1x128xf32>
      %27 = vector.shape_cast %26 : vector<1x128xf32> to vector<1x1x128xf32>
      %c0_23 = arith.constant 0 : index
      %c0_24 = arith.constant 0 : index
      %c0_25 = arith.constant 0 : index
      %28 = vector.load %arg9[%c0_23, %c0_24, %c0_25] : memref<1x1x128xf32, #tpu.memory_space<vmem>>, vector<1x1x128xf32>
      tpu.vector_store %arg9[%c0_23, %c0_24, %c0_25], %27 {strides = array<i32>} : memref<1x1x128xf32, #tpu.memory_space<vmem>>, vector<1x1x128xf32>,
      %29 = arith.negf %26 : vector<1x128xf32>
      %30 = math.exp %29 : vector<1x128xf32>
      %cst_26 = arith.constant 1.000000e+00 : f32
      %31 = vector.broadcast %cst_26 : f32 to vector<1x128xf32>
      %32 = arith.addf %31, %30 : vector<1x128xf32>
      %33 = arith.divf %31, %32 : vector<1x128xf32>
      %c0_27 = arith.constant 0 : index
      %c0_28 = arith.constant 0 : index
      %34 = vector.load %arg7[%c0_27, %c0_28] : memref<128x128xf32, #tpu.memory_space<vmem>>, vector<128x128xf32>
      %cst_29 = arith.constant dense<0.000000e+00> : vector<1x128xf32>
      %35 = tpu.matmul %33, %34, %cst_29 {dimension_numbers = #tpu.dot_dimension_numbers<[1], [0], [0], [1], [0, 0, 1, 1], [], []>} : vector<1x128xf32>, vector<128x128xf32>, vector<1x128xf32> -> vector<1x128xf32>
      %c0_30 = arith.constant 0 : index
      %c0_31 = arith.constant 0 : index
      %36 = vector.load %arg8[%c0_30, %c0_31] : memref<1x128xf32, #tpu.memory_space<vmem>>, vector<1x128xf32>
      %37 = arith.addf %35, %36 : vector<1x128xf32>
      %38 = vector.shape_cast %37 : vector<1x128xf32> to vector<1x1x128xf32>
      %c0_32 = arith.constant 0 : index
      %c0_33 = arith.constant 0 : index
      %c0_34 = arith.constant 0 : index
      %39 = vector.load %arg10[%c0_32, %c0_33, %c0_34] : memref<1x1x128xf32, #tpu.memory_space<vmem>>, vector<1x1x128xf32>
      tpu.vector_store %arg10[%c0_32, %c0_33, %c0_34], %38 {strides = array<i32>} : memref<1x1x128xf32, #tpu.memory_space<vmem>>, vector<1x1x128xf32>,
    } else {
    }
    return
  }
  func.func @transform_0(%arg0: i32, %arg1: i32) -> (i32, i32, i32) {
    %c0_i32 = arith.constant 0 : i32
    %c0_i32_0 = arith.constant 0 : i32
    return %arg0, %arg1, %c0_i32 : i32, i32, i32
  }
  func.func @transform_1(%arg0: i32, %arg1: i32) -> (i32, i32) {
    %c0_i32 = arith.constant 0 : i32
    %c0_i32_0 = arith.constant 0 : i32
    %c0_i32_1 = arith.constant 0 : i32
    return %c0_i32, %c0_i32_0 : i32, i32
  }
  func.func @transform_2(%arg0: i32, %arg1: i32) -> (i32, i32) {
    %c0_i32 = arith.constant 0 : i32
    %c0_i32_0 = arith.constant 0 : i32
    %c0_i32_1 = arith.constant 0 : i32
    return %c0_i32, %c0_i32_0 : i32, i32
  }
  func.func @transform_3(%arg0: i32, %arg1: i32) -> (i32, i32) {
    %c0_i32 = arith.constant 0 : i32
    %c0_i32_0 = arith.constant 0 : i32
    %c0_i32_1 = arith.constant 0 : i32
    return %c0_i32, %c0_i32_0 : i32, i32
  }
  func.func @transform_4(%arg0: i32, %arg1: i32) -> (i32, i32) {
    %c0_i32 = arith.constant 0 : i32
    %c0_i32_0 = arith.constant 0 : i32
    %c0_i32_1 = arith.constant 0 : i32
    return %c0_i32, %c0_i32_0 : i32, i32
  }
  func.func @transform_5(%arg0: i32, %arg1: i32) -> (i32, i32) {
    %c0_i32 = arith.constant 0 : i32
    %c0_i32_0 = arith.constant 0 : i32
    %c0_i32_1 = arith.constant 0 : i32
    return %c0_i32, %c0_i32_0 : i32, i32
  }
  func.func @transform_6(%arg0: i32, %arg1: i32) -> (i32, i32) {
    %c0_i32 = arith.constant 0 : i32
    %c0_i32_0 = arith.constant 0 : i32
    %c0_i32_1 = arith.constant 0 : i32
    return %c0_i32, %c0_i32_0 : i32, i32
  }
  func.func @transform_7(%arg0: i32, %arg1: i32) -> (i32, i32, i32) {
    %c0_i32 = arith.constant 0 : i32
    %c0_i32_0 = arith.constant 0 : i32
    %c0_i32_1 = arith.constant 0 : i32
    return %arg0, %c0_i32, %c0_i32_0 : i32, i32, i32
  }
  func.func @transform_8(%arg0: i32, %arg1: i32) -> (i32, i32, i32) {
    %c0_i32 = arith.constant 0 : i32
    %c0_i32_0 = arith.constant 0 : i32
    %c0_i32_1 = arith.constant 0 : i32
    return %arg0, %c0_i32, %c0_i32_0 : i32, i32, i32
  }
}

</mosaic_0001>

<llo_original>
// kernel: tpu_custom_call.1
$region0: #{tpu_custom_call.1}
  #allocation0 [shape = 'u32[]', space=smem, size = 0x4, offset = 0x4, fixed_abs, tag = 'smem constant byte address 0x4 - core index']
  #allocation1 [shape = 'u32[144,128]{1,0:T(1,128)}', space=vmem, size = 0x12000, scoped, tag = 'internal scratch']
  #allocation2 [shape = 'f32[8,128]{1,0:T(8,128)}', space=vmem, size = 0x1000, scoped, tag = 'scratch operand']
  %s0 = inlined_call_operand.vmem [shape: bf16[2,256,36], index: 0, kind: input, shape index: {}]
  %s1 = inlined_call_operand.vmem [shape: bf16[36,128], index: 1, kind: input, shape index: {}]
  %s2 = inlined_call_operand.vmem [shape: f32[1,128], index: 2, kind: input, shape index: {}]
  %s3 = inlined_call_operand.vmem [shape: f32[128,128], index: 3, kind: input, shape index: {}]
  %s4 = inlined_call_operand.vmem [shape: f32[1,128], index: 4, kind: input, shape index: {}]
  %s5 = inlined_call_operand.vmem [shape: f32[128,128], index: 5, kind: input, shape index: {}]
  %s6 = inlined_call_operand.vmem [shape: f32[1,128], index: 6, kind: input, shape index: {}]
  %s7 = inlined_call_operand.hbm [shape: f32[2,1,128], index: 7, kind: output, shape index: {0}]
  %s8 = inlined_call_operand.hbm [shape: f32[2,1,128], index: 8, kind: output, shape index: {1}]
  %9 = xla_tuple %s7, %s8
  %s10 = sld [smem:[#allocation0]]
  $region77: #{tpu_custom_call.1} parent=0
    _
  %s12 = ssub.s32 1, %s10
  %s13 = scalar_select 0, %s12, %s10
  $region1: #{tpu_custom_call.1} parent=0
    #allocation3 [shape = 'u8[1024]{0}', space=vmem, size = 0x400, scoped, tag = 'output window, operand 0']
    #allocation4 [shape = 's32[2]{0}', space=sflag, size = 0x8, scoped, tag = 'scoped memory for tpu_custom_call.1']
    #allocation5 [shape = 'u8[1024]{0}', space=vmem, size = 0x400, scoped, tag = 'output window, operand 1']
    #allocation6 [shape = 's32[2]{0}', space=sflag, size = 0x8, scoped, tag = 'scoped memory for tpu_custom_call.1']
    %14 = vsyncpa [#allocation4], 0
    %s15 = scalar_lea.sflag [#allocation4], 1
    %16 = vsyncpa %s15, 0
    %17 = vsyncpa [#allocation6], 0
    %s18 = scalar_lea.sflag [#allocation6], 1
    %19 = vsyncpa %s18, 0
    loop: start=0, step=1, limit=4
    $region2: #{tpu_custom_call.1} parent=1 // loop_pre_header
      _
    $region3: #{tpu_custom_call.1} parent=1 // loop_header
      %s21 = sphi 0, %s25
      %p22 = scmp.ge.s32.totalorder %s21, 4
      %s28 = sphi 0, %s40
      %s29 = sphi 0, %s36
      %s30 = sphi 0, %s28
      %s31 = sphi 0, %s29
      %s32 = sphi 0, %s30
      %s33 = sphi 0, %s31
      %s45 = sphi 0, %s47
      %s48 = sphi 0, %s45
      %s49 = sphi 0, %s48
      %s65 = sphi 0, %s49
      %s69 = sphi 0, %s69
      %s71 = sphi 0, %s69
      %s72 = sphi 0, %s71
      %s86 = sphi 0, %s72
      %s90 = sphi 0, %s90
      %s92 = sphi 0, %s90
      %s93 = sphi 0, %s92
      %s107 = sphi 0, %s93
      %s111 = sphi 0, %s111
      %s113 = sphi 0, %s111
      %s114 = sphi 0, %s113
      %s128 = sphi 0, %s114
      %s132 = sphi 0, %s132
      %s134 = sphi 0, %s132
      %s135 = sphi 0, %s134
      %s149 = sphi 0, %s135
      %s153 = sphi 0, %s153
      %s155 = sphi 0, %s153
      %s156 = sphi 0, %s155
      %s170 = sphi 0, %s156
      %s174 = sphi 0, %s174
      %s176 = sphi 0, %s174
      %s177 = sphi 0, %s176
      %s191 = sphi 0, %s177
      %s197 = sphi 0, %s199
      %s200 = sphi 0, %s197
      %s201 = sphi 0, %s200
      %s217 = sphi 0, %s201
      %s223 = sphi 0, %s225
      %s226 = sphi 0, %s223
      %s227 = sphi 0, %s226
      %s243 = sphi 0, %s227
    $region4: #{tpu_custom_call.1} parent=1 // loop_header_branch
      %24 = sbr.rel (%p22) target = $region8
    $region5: #{tpu_custom_call.1} parent=1 // loop_body
      %s26 = ssub.s32 %s21, 1
      %s27 = ssub.s32 %s21, 2
      %s34 = sadd.s32 1, %s29
      %p35 = scmp.ge.s32.totalorder %s34, 1
      %s36 = scalar_select %p35, 0, %s34
      %s37 = sadd.s32 1, %s28
      %s38 = scalar_select %p35, %s37, %s28
      %p39 = scmp.ge.s32.totalorder %s38, 2
      %s40 = scalar_select %p39, 0, %s38
      %s41 = ssub.s32 %s28, %s40
      %s42 = ssub.s32 %s29, %s36
      %s43 = sor.u32 %s41, %s42
      %p44 = scmp.eq.s32.totalorder %s43, 0
      %s46 = sadd.s32 %s45, 1
      %s47 = scalar_select %p44, %s45, %s46
      %p50 = pneg %p44
      %p51 = scmp.eq.s32.totalorder %s21, 1
      %p52 = por %p50, %p51
      %p53 = scmp.ne.s32.totalorder %s45, %s48
      %p54 = scmp.eq.s32.totalorder %s21, 0
      %p55 = por %p53, %p54
      %p56 = scmp.ne.s32.totalorder %s45, %s48
      %p57 = scmp.eq.s32.totalorder %s26, 1
      %p58 = por %p56, %p57
      %p59 = scmp.ne.s32.totalorder %s48, %s49
      %p60 = scmp.eq.s32.totalorder %s26, 0
      %p61 = por %p59, %p60
      %p62 = scmp.ne.s32.totalorder %s48, %s49
      %p63 = scmp.eq.s32.totalorder %s27, 1
      %p64 = por %p62, %p63
      %p66 = scmp.ne.s32.totalorder %s49, %s65
      %p67 = scmp.eq.s32.totalorder %s27, 0
      %p68 = por %p66, %p67
      %s70 = sadd.s32 %s69, 1
      %p73 = scmp.eq.s32.totalorder %s21, 1
      %p74 = scmp.ne.s32.totalorder %s69, %s71
      %p75 = scmp.eq.s32.totalorder %s21, 0
      %p76 = por %p74, %p75
      %p77 = scmp.ne.s32.totalorder %s69, %s71
      %p78 = scmp.eq.s32.totalorder %s26, 1
      %p79 = por %p77, %p78
      %p80 = scmp.ne.s32.totalorder %s71, %s72
      %p81 = scmp.eq.s32.totalorder %s26, 0
      %p82 = por %p80, %p81
      %p83 = scmp.ne.s32.totalorder %s71, %s72
      %p84 = scmp.eq.s32.totalorder %s27, 1
      %p85 = por %p83, %p84
      %p87 = scmp.ne.s32.totalorder %s72, %s86
      %p88 = scmp.eq.s32.totalorder %s27, 0
      %p89 = por %p87, %p88
      %s91 = sadd.s32 %s90, 1
      %p94 = scmp.eq.s32.totalorder %s21, 1
      %p95 = scmp.ne.s32.totalorder %s90, %s92
      %p96 = scmp.eq.s32.totalorder %s21, 0
      %p97 = por %p95, %p96
      %p98 = scmp.ne.s32.totalorder %s90, %s92
      %p99 = scmp.eq.s32.totalorder %s26, 1
      %p100 = por %p98, %p99
      %p101 = scmp.ne.s32.totalorder %s92, %s93
      %p102 = scmp.eq.s32.totalorder %s26, 0
      %p103 = por %p101, %p102
      %p104 = scmp.ne.s32.totalorder %s92, %s93
      %p105 = scmp.eq.s32.totalorder %s27, 1
      %p106 = por %p104, %p105
      %p108 = scmp.ne.s32.totalorder %s93, %s107
      %p109 = scmp.eq.s32.totalorder %s27, 0
      %p110 = por %p108, %p109
      %s112 = sadd.s32 %s111, 1
      %p115 = scmp.eq.s32.totalorder %s21, 1
      %p116 = scmp.ne.s32.totalorder %s111, %s113
      %p117 = scmp.eq.s32.totalorder %s21, 0
      %p118 = por %p116, %p117
      %p119 = scmp.ne.s32.totalorder %s111, %s113
      %p120 = scmp.eq.s32.totalorder %s26, 1
      %p121 = por %p119, %p120
      %p122 = scmp.ne.s32.totalorder %s113, %s114
      %p123 = scmp.eq.s32.totalorder %s26, 0
      %p124 = por %p122, %p123
      %p125 = scmp.ne.s32.totalorder %s113, %s114
      %p126 = scmp.eq.s32.totalorder %s27, 1
      %p127 = por %p125, %p126
      %p129 = scmp.ne.s32.totalorder %s114, %s128
      %p130 = scmp.eq.s32.totalorder %s27, 0
      %p131 = por %p129, %p130
      %s133 = sadd.s32 %s132, 1
      %p136 = scmp.eq.s32.totalorder %s21, 1
      %p137 = scmp.ne.s32.totalorder %s132, %s134
      %p138 = scmp.eq.s32.totalorder %s21, 0
      %p139 = por %p137, %p138
      %p140 = scmp.ne.s32.totalorder %s132, %s134
      %p141 = scmp.eq.s32.totalorder %s26, 1
      %p142 = por %p140, %p141
      %p143 = scmp.ne.s32.totalorder %s134, %s135
      %p144 = scmp.eq.s32.totalorder %s26, 0
      %p145 = por %p143, %p144
      %p146 = scmp.ne.s32.totalorder %s134, %s135
      %p147 = scmp.eq.s32.totalorder %s27, 1
      %p148 = por %p146, %p147
      %p150 = scmp.ne.s32.totalorder %s135, %s149
      %p151 = scmp.eq.s32.totalorder %s27, 0
      %p152 = por %p150, %p151
      %s154 = sadd.s32 %s153, 1
      %p157 = scmp.eq.s32.totalorder %s21, 1
      %p158 = scmp.ne.s32.totalorder %s153, %s155
      %p159 = scmp.eq.s32.totalorder %s21, 0
      %p160 = por %p158, %p159
      %p161 = scmp.ne.s32.totalorder %s153, %s155
      %p162 = scmp.eq.s32.totalorder %s26, 1
      %p163 = por %p161, %p162
      %p164 = scmp.ne.s32.totalorder %s155, %s156
      %p165 = scmp.eq.s32.totalorder %s26, 0
      %p166 = por %p164, %p165
      %p167 = scmp.ne.s32.totalorder %s155, %s156
      %p168 = scmp.eq.s32.totalorder %s27, 1
      %p169 = por %p167, %p168
      %p171 = scmp.ne.s32.totalorder %s156, %s170
      %p172 = scmp.eq.s32.totalorder %s27, 0
      %p173 = por %p171, %p172
      %s175 = sadd.s32 %s174, 1
      %p178 = scmp.eq.s32.totalorder %s21, 1
      %p179 = scmp.ne.s32.totalorder %s174, %s176
      %p180 = scmp.eq.s32.totalorder %s21, 0
      %p181 = por %p179, %p180
      %p182 = scmp.ne.s32.totalorder %s174, %s176
      %p183 = scmp.eq.s32.totalorder %s26, 1
      %p184 = por %p182, %p183
      %p185 = scmp.ne.s32.totalorder %s176, %s177
      %p186 = scmp.eq.s32.totalorder %s26, 0
      %p187 = por %p185, %p186
      %p188 = scmp.ne.s32.totalorder %s176, %s177
      %p189 = scmp.eq.s32.totalorder %s27, 1
      %p190 = por %p188, %p189
      %p192 = scmp.ne.s32.totalorder %s177, %s191
      %p193 = scmp.eq.s32.totalorder %s27, 0
      %p194 = por %p192, %p193
      %s195 = ssub.s32 %s28, %s40
      %p196 = scmp.eq.s32.totalorder %s195, 0
      %s198 = sadd.s32 %s197, 1
      %s199 = scalar_select %p196, %s197, %s198
      %p202 = pneg %p196
      %p203 = scmp.eq.s32.totalorder %s21, 1
      %p204 = por %p202, %p203
      %p205 = scmp.ne.s32.totalorder %s197, %s200
      %p206 = scmp.eq.s32.totalorder %s21, 0
      %p207 = por %p205, %p206
      %p208 = scmp.ne.s32.totalorder %s197, %s200
      %p209 = scmp.eq.s32.totalorder %s26, 1
      %p210 = por %p208, %p209
      %p211 = scmp.ne.s32.totalorder %s200, %s201
      %p212 = scmp.eq.s32.totalorder %s26, 0
      %p213 = por %p211, %p212
      %p214 = scmp.ne.s32.totalorder %s200, %s201
      %p215 = scmp.eq.s32.totalorder %s27, 1
      %p216 = por %p214, %p215
      %p218 = scmp.ne.s32.totalorder %s201, %s217
      %p219 = scmp.eq.s32.totalorder %s27, 0
      %p220 = por %p218, %p219
      %s221 = ssub.s32 %s28, %s40
      %p222 = scmp.eq.s32.totalorder %s221, 0
      %s224 = sadd.s32 %s223, 1
      %s225 = scalar_select %p222, %s223, %s224
      %p228 = pneg %p222
      %p229 = scmp.eq.s32.totalorder %s21, 1
      %p230 = por %p228, %p229
      %p231 = scmp.ne.s32.totalorder %s223, %s226
      %p232 = scmp.eq.s32.totalorder %s21, 0
      %p233 = por %p231, %p232
      %p234 = scmp.ne.s32.totalorder %s223, %s226
      %p235 = scmp.eq.s32.totalorder %s26, 1
      %p236 = por %p234, %p235
      %p237 = scmp.ne.s32.totalorder %s226, %s227
      %p238 = scmp.eq.s32.totalorder %s26, 0
      %p239 = por %p237, %p238
      %p240 = scmp.ne.s32.totalorder %s226, %s227
      %p241 = scmp.eq.s32.totalorder %s27, 1
      %p242 = por %p240, %p241
      %p244 = scmp.ne.s32.totalorder %s227, %s243
      %p245 = scmp.eq.s32.totalorder %s27, 0
      %p246 = por %p244, %p245
      %p247 = scmp.le.s32.totalorder 1, %s21
      %p248 = scmp.lt.s32.totalorder %s21, 3
      %p249 = pnand %p247, %p248
      %p250 = pneg %p249
      // Predicated region
      $region9: #{tpu_custom_call.1} parent=5 // pred_check
        _
      $region10: #{tpu_custom_call.1} parent=5 // pred_check_branch
        %252 = sbr.rel (%p249) target = $region12
      $region11: #{tpu_custom_call.1} parent=5 // pred_region
        %s253 = ssub.s32 %s21, 1
        // Predicated region
        $region13: #{tpu_custom_call.1} parent=11 // pred_check
          %p254 = pneg %p82
        $region14: #{tpu_custom_call.1} parent=11 // pred_check_branch
          %256 = sbr.rel (%p254) target = $region16
        $region15: #{tpu_custom_call.1} parent=11 // pred_region
          _
        $region16: #{tpu_custom_call.1} parent=11 // pred_fallthru
          _
        // Predicated region
        $region17: #{tpu_custom_call.1} parent=11 // pred_check
          %p257 = pneg %p103
        $region18: #{tpu_custom_call.1} parent=11 // pred_check_branch
          %259 = sbr.rel (%p257) target = $region20
        $region19: #{tpu_custom_call.1} parent=11 // pred_region
          _
        $region20: #{tpu_custom_call.1} parent=11 // pred_fallthru
          _
        // Predicated region
        $region21: #{tpu_custom_call.1} parent=11 // pred_check
          %p260 = pneg %p124
        $region22: #{tpu_custom_call.1} parent=11 // pred_check_branch
          %262 = sbr.rel (%p260) target = $region24
        $region23: #{tpu_custom_call.1} parent=11 // pred_region
          _
        $region24: #{tpu_custom_call.1} parent=11 // pred_fallthru
          _
        // Predicated region
        $region25: #{tpu_custom_call.1} parent=11 // pred_check
          %p263 = pneg %p145
        $region26: #{tpu_custom_call.1} parent=11 // pred_check_branch
          %265 = sbr.rel (%p263) target = $region28
        $region27: #{tpu_custom_call.1} parent=11 // pred_region
          _
        $region28: #{tpu_custom_call.1} parent=11 // pred_fallthru
          _
        // Predicated region
        $region29: #{tpu_custom_call.1} parent=11 // pred_check
          %p266 = pneg %p166
        $region30: #{tpu_custom_call.1} parent=11 // pred_check_branch
          %268 = sbr.rel (%p266) target = $region32
        $region31: #{tpu_custom_call.1} parent=11 // pred_region
          _
        $region32: #{tpu_custom_call.1} parent=11 // pred_fallthru
          _
        // Predicated region
        $region33: #{tpu_custom_call.1} parent=11 // pred_check
          %p269 = pneg %p187
        $region34: #{tpu_custom_call.1} parent=11 // pred_check_branch
          %271 = sbr.rel (%p269) target = $region36
        $region35: #{tpu_custom_call.1} parent=11 // pred_region
          _
        $region36: #{tpu_custom_call.1} parent=11 // pred_fallthru
          _
      $region12: #{tpu_custom_call.1} parent=5 // pred_fallthru
        _
      %p272 = scmp.lt.s32.totalorder %s21, 2
      // Predicated region
      $region37: #{tpu_custom_call.1} parent=5 // pred_check
        %p273 = pneg %p272
      $region38: #{tpu_custom_call.1} parent=5 // pred_check_branch
        %275 = sbr.rel (%p273) target = $region40
      $region39: #{tpu_custom_call.1} parent=5 // pred_region
        // Predicated region
        $region41: #{tpu_custom_call.1} parent=39 // pred_check
          %p276 = pneg %p55
        $region42: #{tpu_custom_call.1} parent=39 // pred_check_branch
          %278 = sbr.rel (%p276) target = $region44
        $region43: #{tpu_custom_call.1} parent=39 // pred_region
          %s279 = smul.u32 32, %s29
          %p280 = scmp.lt.s32.totalorder %s28, 1
          %s281 = scalar_select %p280, %s28, 1
          %p282 = scmp.lt.s32.totalorder %s279, 31
          %s283 = scalar_select %p282, %s279, 31
          %s284 = smul.addr %s281, 32
          %s285 = sadd.s32 %s283, %s284
          %s286 = smul.addr %s285, 4
          %s287 = scalar_lea.vmem %s0, %s286
          %s288 = smul.u32 32, %s29
        $region44: #{tpu_custom_call.1} parent=39 // pred_fallthru
          _
      $region40: #{tpu_custom_call.1} parent=5 // pred_fallthru
        _
      %p289 = scmp.le.s32.totalorder 1, %s21
      %p290 = scmp.lt.s32.totalorder %s21, 3
      %p291 = pnand %p289, %p290
      %p292 = pneg %p291
      // Predicated region
      $region45: #{tpu_custom_call.1} parent=5 // pred_check
        _
      $region46: #{tpu_custom_call.1} parent=5 // pred_check_branch
        %294 = sbr.rel (%p291) target = $region48
      $region47: #{tpu_custom_call.1} parent=5 // pred_region
        %s295 = ssub.s32 %s21, 1
        %s296 = smul.u32 32, %s31
        %p297 = scmp.lt.s32.totalorder %s30, 1
        %s298 = scalar_select %p297, %s30, 1
        %p299 = scmp.lt.s32.totalorder %s296, 31
        %s300 = scalar_select %p299, %s296, 31
        %s301 = smul.addr %s298, 32
        %s302 = sadd.s32 %s300, %s301
        %s303 = smul.addr %s302, 4
        %s304 = scalar_lea.vmem %s0, %s303
        %p305 = pneg %p61
        %p306 = pneg %p58
        %p307 = pneg %p82
        %p308 = pneg %p79
        %p309 = pneg %p103
        %p310 = pneg %p100
        %p311 = pneg %p124
        %p312 = pneg %p121
        %p313 = pneg %p145
        %p314 = pneg %p142
        %p315 = pneg %p166
        %p316 = pneg %p163
        %p317 = pneg %p187
        %p318 = pneg %p184
        %p319 = pneg %p213
        %p320 = pneg %p210
        %s321 = sand.u32 %s200, 1
        %s322 = scalar_lea.sflag [#allocation4], %s321
        %s323 = sand.u32 %s200, 1
        %s324 = scalar_lea.vmem [#allocation3], %s323
        %p325 = pneg %p239
        %p326 = pneg %p236
        %s327 = sand.u32 %s226, 1
        %s328 = scalar_lea.sflag [#allocation6], %s327
        %s329 = sand.u32 %s226, 1
        %s330 = scalar_lea.vmem [#allocation5], %s329
        %s331 = smul.u32 32, %s31
        %p332 = scmp.lt.s32.totalorder %s30, 1
        %s333 = scalar_select %p332, %s30, 1
        %p334 = scmp.lt.s32.totalorder %s331, 31
        %s335 = scalar_select %p334, %s331, 31
        %s336 = smul.addr %s333, 32
        %s337 = sadd.s32 %s335, %s336
        %s338 = smul.addr %s337, 4
        %s339 = scalar_lea.vmem %s0, %s338
        %s340 = smul.u32 32, %s31
        %p342 = scmp.eq.s32.totalorder %s31, 0
        // Predicated region
        $region49: #{tpu_custom_call.1} parent=47 // pred_check
          %p343 = pneg %p342
        $region50: #{tpu_custom_call.1} parent=47 // pred_check_branch
          %345 = sbr.rel (%p343) target = $region52
        $region51: #{tpu_custom_call.1} parent=47 // pred_region
          %346 = vst [vmem:[#allocation2] sm:$0xff] 0.0
        $region52: #{tpu_custom_call.1} parent=47 // pred_fallthru
          _
        %v347 = vld [vmem:[%s339] sm:$0xf]
        %v348 = vld [vmem:[%s339 + $0x4] sm:$0xf]
        %v349 = vld [vmem:[%s339 + $0x8] sm:$0xf]
        %v350 = vld [vmem:[%s339 + $0xc] sm:$0xf]
        %v351 = vld [vmem:[%s339 + $0x10] sm:$0xf]
        %v352 = vld [vmem:[%s339 + $0x14] sm:$0xf]
        %v353 = vld [vmem:[%s339 + $0x18] sm:$0xf]
        %v354 = vld [vmem:[%s339 + $0x1c] sm:$0xf]
        %v355 = vld [vmem:[%s339 + $0x20] sm:$0xf]
        %v356 = vld [vmem:[%s339 + $0x24] sm:$0xf]
        %v357 = vld [vmem:[%s339 + $0x28] sm:$0xf]
        %v358 = vld [vmem:[%s339 + $0x2c] sm:$0xf]
        %v359 = vld [vmem:[%s339 + $0x30] sm:$0xf]
        %v360 = vld [vmem:[%s339 + $0x34] sm:$0xf]
        %v361 = vld [vmem:[%s339 + $0x38] sm:$0xf]
        %v362 = vld [vmem:[%s339 + $0x3c] sm:$0xf]
        %v363 = vld [vmem:[%s339 + $0x40] sm:$0xf]
        %v364 = vld [vmem:[%s339 + $0x44] sm:$0xf]
        %v365 = vld [vmem:[%s339 + $0x48] sm:$0xf]
        %v366 = vld [vmem:[%s339 + $0x4c] sm:$0xf]
        %v367 = vld [vmem:[%s339 + $0x50] sm:$0xf]
        %v368 = vld [vmem:[%s339 + $0x54] sm:$0xf]
        %v369 = vld [vmem:[%s339 + $0x58] sm:$0xf]
        %v370 = vld [vmem:[%s339 + $0x5c] sm:$0xf]
        %v371 = vld [vmem:[%s339 + $0x60] sm:$0xf]
        %v372 = vld [vmem:[%s339 + $0x64] sm:$0xf]
        %v373 = vld [vmem:[%s339 + $0x68] sm:$0xf]
        %v374 = vld [vmem:[%s339 + $0x6c] sm:$0xf]
        %v375 = vld [vmem:[%s339 + $0x70] sm:$0xf]
        %v376 = vld [vmem:[%s339 + $0x74] sm:$0xf]
        %v377 = vld [vmem:[%s339 + $0x78] sm:$0xf]
        %v378 = vld [vmem:[%s339 + $0x7c] sm:$0xf]
        %v379 = vld [vmem:[%s1] sm:$0xf]
        %v380 = vld [vmem:[%s1 + $0x4] sm:$0xf]
        %v381 = vld [vmem:[%s1 + $0x8] sm:$0xf]
        %v382 = vld [vmem:[%s1 + $0xc] sm:$0xf]
        %v383 = vld [vmem:[%s1 + $0x10] sm:$0x3]
        %v384 = vld [vmem:[%s2] sm:$0x1]
        %v386 = vlaneseq
        %v387 = vshrl.u32 %v386, 7
        %v388 = vsub.s32 0, %v387
        %v389 = vrot.slane %v384, %v388
        %v423 = vunpack.c.l.b16 %v347
        %v424 = vunpack.c.l.b16 %v348
        %v425 = vunpack.c.l.b16 %v349
        %v426 = vunpack.c.l.b16 %v350
        %v427 = vunpack.c.l.b16 %v351
        %v428 = vunpack.c.l.b16 %v352
        %v429 = vunpack.c.l.b16 %v353
        %v430 = vunpack.c.l.b16 %v354
        %v431 = vunpack.c.l.b16 %v355
        %v432 = vunpack.c.l.b16 %v356
        %v433 = vunpack.c.l.b16 %v357
        %v434 = vunpack.c.l.b16 %v358
        %v435 = vunpack.c.l.b16 %v359
        %v436 = vunpack.c.l.b16 %v360
        %v437 = vunpack.c.l.b16 %v361
        %v438 = vunpack.c.l.b16 %v362
        %v439 = vunpack.c.l.b16 %v363
        %v440 = vunpack.c.l.b16 %v364
        %v441 = vunpack.c.l.b16 %v365
        %v442 = vunpack.c.l.b16 %v366
        %v443 = vunpack.c.l.b16 %v367
        %v444 = vunpack.c.l.b16 %v368
        %v445 = vunpack.c.l.b16 %v369
        %v446 = vunpack.c.l.b16 %v370
        %v447 = vunpack.c.l.b16 %v371
        %v448 = vunpack.c.l.b16 %v372
        %v449 = vunpack.c.l.b16 %v373
        %v450 = vunpack.c.l.b16 %v374
        %v451 = vunpack.c.l.b16 %v375
        %v452 = vunpack.c.l.b16 %v376
        %v453 = vunpack.c.l.b16 %v377
        %v454 = vunpack.c.l.b16 %v378
        %v455 = vpack.c.b16 %v424, %v423
        %v456 = vpack.c.b16 %v426, %v425
        %v457 = vpack.c.b16 %v428, %v427
        %v458 = vpack.c.b16 %v430, %v429
        %v459 = vpack.c.b16 %v432, %v431
        %v460 = vpack.c.b16 %v434, %v433
        %v461 = vpack.c.b16 %v436, %v435
        %v462 = vpack.c.b16 %v438, %v437
        %v463 = vpack.c.b16 %v440, %v439
        %v464 = vpack.c.b16 %v442, %v441
        %v465 = vpack.c.b16 %v444, %v443
        %v466 = vpack.c.b16 %v446, %v445
        %v467 = vpack.c.b16 %v448, %v447
        %v468 = vpack.c.b16 %v450, %v449
        %v469 = vpack.c.b16 %v452, %v451
        %v470 = vpack.c.b16 %v454, %v453
        %v476 = vunpack.c.l.b16 %v379
        %v477 = vunpack.c.l.b16 %v380
        %v478 = vunpack.c.l.b16 %v381
        %v479 = vunpack.c.l.b16 %v382
        %v480 = vunpack.c.l.b16 %v383
        %v481 = vpack.c.b16 %v477, %v476
        %v482 = vpack.c.b16 %v479, %v478
        %v483 = vpack.c.b16 %v480, %v480
        %vm486 = vcmask 293888
        %v488 = vsel %vm486, %v455, 0
        %v491 = vsel %vm486, %v456, 0
        %v494 = vsel %vm486, %v457, 0
        %v497 = vsel %vm486, %v458, 0
        %v500 = vsel %vm486, %v459, 0
        %v503 = vsel %vm486, %v460, 0
        %v506 = vsel %vm486, %v461, 0
        %v509 = vsel %vm486, %v462, 0
        %v512 = vsel %vm486, %v463, 0
        %v515 = vsel %vm486, %v464, 0
        %v518 = vsel %vm486, %v465, 0
        %v521 = vsel %vm486, %v466, 0
        %v524 = vsel %vm486, %v467, 0
        %v527 = vsel %vm486, %v468, 0
        %v530 = vsel %vm486, %v469, 0
        %v533 = vsel %vm486, %v470, 0
        %vm535 = vcmask 1041408
        %v537 = vsel %vm535, %v483, 0
        %539 = vmatprep.subr.bf16.mxu0 0
        %540 = vmatpush1.bf16.msra.mxu0 0
        %541 = vmatprep.subr.bf16.mxu0 0
        %542 = vmatpush1.bf16.msra.mxu0 0
        %543 = vmatprep.subr.bf16.mxu0 0
        %544 = vmatpush1.bf16.msra.mxu0 0
        %545 = vmatprep.subr.bf16.mxu0 0
        %546 = vmatpush1.bf16.msra.mxu0 0
        %547 = vmatprep.subr.bf16.mxu0 0
        %548 = vmatpush1.bf16.msra.mxu0 0
        %549 = vmatprep.subr.bf16.mxu0 0
        %550 = vmatpush1.bf16.msra.mxu0 %v537
        %551 = vmatprep.subr.bf16.mxu0 0
        %552 = vmatpush1.bf16.msra.mxu0 %v482
        %553 = vmatprep.subr.bf16.mxu0 0
        %554 = vmatpush1.bf16.msra.mxu0 %v481
        %555 = vmatprep.subr.bf16.mxu0 0
        %556 = vmatpush2.bf16.msra.mxu0 0
        %557 = vmatprep.subr.bf16.mxu0 0
        %558 = vmatpush2.bf16.msra.mxu0 0
        %559 = vmatprep.subr.bf16.mxu0 0
        %560 = vmatpush2.bf16.msra.mxu0 0
        %561 = vmatprep.subr.bf16.mxu0 0
        %562 = vmatpush2.bf16.msra.mxu0 0
        %563 = vmatprep.subr.bf16.mxu0 0
        %564 = vmatpush2.bf16.msra.mxu0 0
        %565 = vmatprep.subr.bf16.mxu0 0
        %566 = vmatpush2.bf16.msra.mxu0 0
        %567 = vmatprep.subr.bf16.mxu0 0
        %568 = vmatpush2.bf16.msra.mxu0 0
        %569 = vmatprep.subr.bf16.mxu0 0
        %570 = vmatpush2.bf16.msra.mxu0 0
        %571 = vmatprep.mubr.bf16.mxu0 0
        %572 = vmatmul.mubr.bf16.gmra.mxu0 %v488
        %v573 = vpop.f32.mrf.mxu0
        %v574 = vadd.f32 %v389, %v573
        %v575 = vpop.f32.mrf.mxu0
        %v576 = vpop.f32.mrf.mxu0
        %v577 = vadd.f32 %v389, %v576
        %v578 = vpop.f32.mrf.mxu0
        %579 = vmatprep.mubr.bf16.mxu0 0
        %580 = vmatmul.mubr.bf16.gmra.mxu0 %v491
        %v581 = vpop.f32.mrf.mxu0
        %v582 = vadd.f32 %v389, %v581
        %v583 = vpop.f32.mrf.mxu0
        %v584 = vpop.f32.mrf.mxu0
        %v585 = vadd.f32 %v389, %v584
        %v586 = vpop.f32.mrf.mxu0
        %587 = vmatprep.mubr.bf16.mxu0 0
        %588 = vmatmul.mubr.bf16.gmra.mxu0 %v494
        %v589 = vpop.f32.mrf.mxu0
        %v590 = vadd.f32 %v389, %v589
        %v591 = vpop.f32.mrf.mxu0
        %v592 = vpop.f32.mrf.mxu0
        %v593 = vadd.f32 %v389, %v592
        %v594 = vpop.f32.mrf.mxu0
        %595 = vmatprep.mubr.bf16.mxu0 0
        %596 = vmatmul.mubr.bf16.gmra.mxu0 %v497
        %v597 = vpop.f32.mrf.mxu0
        %v598 = vadd.f32 %v389, %v597
        %v599 = vpop.f32.mrf.mxu0
        %v600 = vpop.f32.mrf.mxu0
        %v601 = vadd.f32 %v389, %v600
        %v602 = vpop.f32.mrf.mxu0
        %603 = vmatprep.mubr.bf16.mxu0 0
        %604 = vmatmul.mubr.bf16.gmra.mxu0 %v500
        %v605 = vpop.f32.mrf.mxu0
        %v606 = vadd.f32 %v389, %v605
        %v607 = vpop.f32.mrf.mxu0
        %v608 = vpop.f32.mrf.mxu0
        %v609 = vadd.f32 %v389, %v608
        %v610 = vpop.f32.mrf.mxu0
        %611 = vmatprep.mubr.bf16.mxu0 0
        %612 = vmatmul.mubr.bf16.gmra.mxu0 %v503
        %v613 = vpop.f32.mrf.mxu0
        %v614 = vadd.f32 %v389, %v613
        %v615 = vpop.f32.mrf.mxu0
        %v616 = vpop.f32.mrf.mxu0
        %v617 = vadd.f32 %v389, %v616
        %v618 = vpop.f32.mrf.mxu0
        %619 = vmatprep.mubr.bf16.mxu0 0
        %620 = vmatmul.mubr.bf16.gmra.mxu0 %v506
        %v621 = vpop.f32.mrf.mxu0
        %v622 = vadd.f32 %v389, %v621
        %v623 = vpop.f32.mrf.mxu0
        %v624 = vpop.f32.mrf.mxu0
        %v625 = vadd.f32 %v389, %v624
        %v626 = vpop.f32.mrf.mxu0
        %627 = vmatprep.mubr.bf16.mxu0 0
        %628 = vmatmul.mubr.bf16.gmra.mxu0 %v509
        %v629 = vpop.f32.mrf.mxu0
        %v630 = vadd.f32 %v389, %v629
        %v631 = vpop.f32.mrf.mxu0
        %v632 = vpop.f32.mrf.mxu0
        %v633 = vadd.f32 %v389, %v632
        %v634 = vpop.f32.mrf.mxu0
        %635 = vmatprep.mubr.bf16.mxu0 0
        %636 = vmatmul.mubr.bf16.gmra.mxu0 %v512
        %v637 = vpop.f32.mrf.mxu0
        %v638 = vadd.f32 %v389, %v637
        %v639 = vpop.f32.mrf.mxu0
        %v640 = vpop.f32.mrf.mxu0
        %v641 = vadd.f32 %v389, %v640
        %v642 = vpop.f32.mrf.mxu0
        %643 = vmatprep.mubr.bf16.mxu0 0
        %644 = vmatmul.mubr.bf16.gmra.mxu0 %v515
        %v645 = vpop.f32.mrf.mxu0
        %v646 = vadd.f32 %v389, %v645
        %v647 = vpop.f32.mrf.mxu0
        %v648 = vpop.f32.mrf.mxu0
        %v649 = vadd.f32 %v389, %v648
        %v650 = vpop.f32.mrf.mxu0
        %651 = vmatprep.mubr.bf16.mxu0 0
        %652 = vmatmul.mubr.bf16.gmra.mxu0 %v518
        %v653 = vpop.f32.mrf.mxu0
        %v654 = vadd.f32 %v389, %v653
        %v655 = vpop.f32.mrf.mxu0
        %v656 = vpop.f32.mrf.mxu0
        %v657 = vadd.f32 %v389, %v656
        %v658 = vpop.f32.mrf.mxu0
        %659 = vmatprep.mubr.bf16.mxu0 0
        %660 = vmatmul.mubr.bf16.gmra.mxu0 %v521
        %v661 = vpop.f32.mrf.mxu0
        %v662 = vadd.f32 %v389, %v661
        %v663 = vpop.f32.mrf.mxu0
        %v664 = vpop.f32.mrf.mxu0
        %v665 = vadd.f32 %v389, %v664
        %v666 = vpop.f32.mrf.mxu0
        %667 = vmatprep.mubr.bf16.mxu0 0
        %668 = vmatmul.mubr.bf16.gmra.mxu0 %v524
        %v669 = vpop.f32.mrf.mxu0
        %v670 = vadd.f32 %v389, %v669
        %v671 = vpop.f32.mrf.mxu0
        %v672 = vpop.f32.mrf.mxu0
        %v673 = vadd.f32 %v389, %v672
        %v674 = vpop.f32.mrf.mxu0
        %675 = vmatprep.mubr.bf16.mxu0 0
        %676 = vmatmul.mubr.bf16.gmra.mxu0 %v527
        %v677 = vpop.f32.mrf.mxu0
        %v678 = vadd.f32 %v389, %v677
        %v679 = vpop.f32.mrf.mxu0
        %v680 = vpop.f32.mrf.mxu0
        %v681 = vadd.f32 %v389, %v680
        %v682 = vpop.f32.mrf.mxu0
        %683 = vmatprep.mubr.bf16.mxu0 0
        %684 = vmatmul.mubr.bf16.gmra.mxu0 %v530
        %v685 = vpop.f32.mrf.mxu0
        %v686 = vadd.f32 %v389, %v685
        %v687 = vpop.f32.mrf.mxu0
        %v688 = vpop.f32.mrf.mxu0
        %v689 = vadd.f32 %v389, %v688
        %v690 = vpop.f32.mrf.mxu0
        %691 = vmatprep.mubr.bf16.mxu0 0
        %692 = vmatmul.mubr.bf16.gmra.mxu0 %v533
        %v693 = vpop.f32.mrf.mxu0
        %v694 = vadd.f32 %v389, %v693
        %v695 = vpop.f32.mrf.mxu0
        %v696 = vpop.f32.mrf.mxu0
        %v697 = vadd.f32 %v389, %v696
        %v698 = vpop.f32.mrf.mxu0
        %699 = vdwg.mxu0
        %v700 = vmax.f32 %v574, 0.0
        %v701 = vmax.f32 %v577, 0.0
        %v702 = vmax.f32 %v582, 0.0
        %v703 = vmax.f32 %v585, 0.0
        %v704 = vmax.f32 %v590, 0.0
        %v705 = vmax.f32 %v593, 0.0
        %v706 = vmax.f32 %v598, 0.0
        %v707 = vmax.f32 %v601, 0.0
        %v708 = vmax.f32 %v606, 0.0
        %v709 = vmax.f32 %v609, 0.0
        %v710 = vmax.f32 %v614, 0.0
        %v711 = vmax.f32 %v617, 0.0
        %v712 = vmax.f32 %v622, 0.0
        %v713 = vmax.f32 %v625, 0.0
        %v714 = vmax.f32 %v630, 0.0
        %v715 = vmax.f32 %v633, 0.0
        %v716 = vmax.f32 %v638, 0.0
        %v717 = vmax.f32 %v641, 0.0
        %v718 = vmax.f32 %v646, 0.0
        %v719 = vmax.f32 %v649, 0.0
        %v720 = vmax.f32 %v654, 0.0
        %v721 = vmax.f32 %v657, 0.0
        %v722 = vmax.f32 %v662, 0.0
        %v723 = vmax.f32 %v665, 0.0
        %v724 = vmax.f32 %v670, 0.0
        %v725 = vmax.f32 %v673, 0.0
        %v726 = vmax.f32 %v678, 0.0
        %v727 = vmax.f32 %v681, 0.0
        %v728 = vmax.f32 %v686, 0.0
        %v729 = vmax.f32 %v689, 0.0
        %v730 = vmax.f32 %v694, 0.0
        %v731 = vmax.f32 %v697, 0.0
        %v732 = vld [vmem:[#allocation2] sm:$0xff]
        %v733 = vadd.f32 %v700, %v701
        %v734 = vadd.f32 %v733, %v702
        %v735 = vadd.f32 %v734, %v703
        %v736 = vadd.f32 %v735, %v704
        %v737 = vadd.f32 %v736, %v705
        %v738 = vadd.f32 %v737, %v706
        %v739 = vadd.f32 %v738, %v707
        %v740 = vadd.f32 %v739, %v708
        %v741 = vadd.f32 %v740, %v709
        %v742 = vadd.f32 %v741, %v710
        %v743 = vadd.f32 %v742, %v711
        %v744 = vadd.f32 %v743, %v712
        %v745 = vadd.f32 %v744, %v713
        %v746 = vadd.f32 %v745, %v714
        %v747 = vadd.f32 %v746, %v715
        %v748 = vadd.f32 %v747, %v716
        %v749 = vadd.f32 %v748, %v717
        %v750 = vadd.f32 %v749, %v718
        %v751 = vadd.f32 %v750, %v719
        %v752 = vadd.f32 %v751, %v720
        %v753 = vadd.f32 %v752, %v721
        %v754 = vadd.f32 %v753, %v722
        %v755 = vadd.f32 %v754, %v723
        %v756 = vadd.f32 %v755, %v724
        %v757 = vadd.f32 %v756, %v725
        %v758 = vadd.f32 %v757, %v726
        %v759 = vadd.f32 %v758, %v727
        %v760 = vadd.f32 %v759, %v728
        %v761 = vadd.f32 %v760, %v729
        %v762 = vadd.f32 %v761, %v730
        %v763 = vadd.f32 %v762, %v731
        %v764 = vadd.f32 %v732, %v763
        %765 = vst [vmem:[#allocation2] sm:$0xff] %v764
        // Predicated region
        $region53: #{tpu_custom_call.1} parent=47 // pred_check
          %p766 = pneg %p342
        $region54: #{tpu_custom_call.1} parent=47 // pred_check_branch
          %768 = sbr.rel (%p766) target = $region56
        $region55: #{tpu_custom_call.1} parent=47 // pred_region
          %v769 = vld [vmem:[#allocation2] sm:$0xff]
          %v770 = vrot.slane %v769, 4
          %v771 = vadd.f32 %v769, %v770
          %v772 = vrot.slane %v771, 2
          %v773 = vadd.f32 %v771, %v772
          %v774 = vrot.slane %v773, 1
          %v775 = vadd.f32 %v773, %v774
          %v776 = vld [vmem:[%s3] sm:$0xff]
          %v777 = vld [vmem:[%s3 + $0x8] sm:$0xff]
          %v778 = vld [vmem:[%s3 + $0x10] sm:$0xff]
          %v779 = vld [vmem:[%s3 + $0x18] sm:$0xff]
          %v780 = vld [vmem:[%s3 + $0x20] sm:$0xff]
          %v781 = vld [vmem:[%s3 + $0x28] sm:$0xff]
          %v782 = vld [vmem:[%s3 + $0x30] sm:$0xff]
          %v783 = vld [vmem:[%s3 + $0x38] sm:$0xff]
          %v784 = vld [vmem:[%s3 + $0x40] sm:$0xff]
          %v785 = vld [vmem:[%s3 + $0x48] sm:$0xff]
          %v786 = vld [vmem:[%s3 + $0x50] sm:$0xff]
          %v787 = vld [vmem:[%s3 + $0x58] sm:$0xff]
          %v788 = vld [vmem:[%s3 + $0x60] sm:$0xff]
          %v789 = vld [vmem:[%s3 + $0x68] sm:$0xff]
          %v790 = vld [vmem:[%s3 + $0x70] sm:$0xff]
          %v791 = vld [vmem:[%s3 + $0x78] sm:$0xff]
          %v792 = vld [vmem:[%s4] sm:$0x1]
          %793 = vmatprep.subr.mxu0 0.0
          %794 = vmatpush1.msra.mxu0 %v791
          %795 = vmatprep.subr.mxu0 0.0
          %796 = vmatpush1.msra.mxu0 %v790
          %797 = vmatprep.subr.mxu0 0.0
          %798 = vmatpush1.msra.mxu0 %v789
          %799 = vmatprep.subr.mxu0 0.0
          %800 = vmatpush1.msra.mxu0 %v788
          %801 = vmatprep.subr.mxu0 0.0
          %802 = vmatpush1.msra.mxu0 %v787
          %803 = vmatprep.subr.mxu0 0.0
          %804 = vmatpush1.msra.mxu0 %v786
          %805 = vmatprep.subr.mxu0 0.0
          %806 = vmatpush1.msra.mxu0 %v785
          %807 = vmatprep.subr.mxu0 0.0
          %808 = vmatpush1.msra.mxu0 %v784
          %809 = vmatprep.subr.mxu0 0.0
          %810 = vmatpush1.msra.mxu0 %v783
          %811 = vmatprep.subr.mxu0 0.0
          %812 = vmatpush1.msra.mxu0 %v782
          %813 = vmatprep.subr.mxu0 0.0
          %814 = vmatpush1.msra.mxu0 %v781
          %815 = vmatprep.subr.mxu0 0.0
          %816 = vmatpush1.msra.mxu0 %v780
          %817 = vmatprep.subr.mxu0 0.0
          %818 = vmatpush1.msra.mxu0 %v779
          %819 = vmatprep.subr.mxu0 0.0
          %820 = vmatpush1.msra.mxu0 %v778
          %821 = vmatprep.subr.mxu0 0.0
          %822 = vmatpush1.msra.mxu0 %v777
          %823 = vmatprep.subr.mxu0 0.0
          %824 = vmatpush1.msra.mxu0 %v776
          %825 = vmatprep.subr.mxu0 0.0
          %826 = vmatpush2.msra.mxu0 0.0
          %827 = vmatprep.subr.mxu0 0.0
          %828 = vmatpush2.msra.mxu0 0.0
          %829 = vmatprep.subr.mxu0 0.0
          %830 = vmatpush2.msra.mxu0 0.0
          %831 = vmatprep.subr.mxu0 0.0
          %832 = vmatpush2.msra.mxu0 0.0
          %833 = vmatprep.subr.mxu0 0.0
          %834 = vmatpush2.msra.mxu0 0.0
          %835 = vmatprep.subr.mxu0 0.0
          %836 = vmatpush2.msra.mxu0 0.0
          %837 = vmatprep.subr.mxu0 0.0
          %838 = vmatpush2.msra.mxu0 0.0
          %839 = vmatprep.subr.mxu0 0.0
          %840 = vmatpush2.msra.mxu0 0.0
          %841 = vmatprep.subr.mxu0 0.0
          %842 = vmatpush2.msra.mxu0 0.0
          %843 = vmatprep.subr.mxu0 0.0
          %844 = vmatpush2.msra.mxu0 0.0
          %845 = vmatprep.subr.mxu0 0.0
          %846 = vmatpush2.msra.mxu0 0.0
          %847 = vmatprep.subr.mxu0 0.0
          %848 = vmatpush2.msra.mxu0 0.0
          %849 = vmatprep.subr.mxu0 0.0
          %850 = vmatpush2.msra.mxu0 0.0
          %851 = vmatprep.subr.mxu0 0.0
          %852 = vmatpush2.msra.mxu0 0.0
          %853 = vmatprep.subr.mxu0 0.0
          %854 = vmatpush2.msra.mxu0 0.0
          %855 = vmatprep.subr.mxu0 0.0
          %856 = vmatpush2.msra.mxu0 0.0
          %857 = vmatprep.mubr.f32.mxu0 0.0
          %858 = vmatmul.mubr.f32.gmra.mxu0 %v775
          %v859 = vpop.f32.mrf.mxu0
          %v860 = vadd.f32 %v792, %v859
          %v861 = vpop.f32.mrf.mxu0
          %862 = vdwg.mxu0
          %863 = vst [vmem:[%s324] sm:$0x1] %v860
          %v864 = vxor.u32 %v860, 2147483648
          %v865 = vmul.f32 %v864, 1.442695
          %v866 = vpow.pop %v865
          %v867 = vadd.f32 %v866, 1.0
          %v868 = vrcp.pop %v867
          %v869 = vmul.f32 1.0, %v868
          %v870 = vld [vmem:[%s5] sm:$0xff]
          %v871 = vld [vmem:[%s5 + $0x8] sm:$0xff]
          %v872 = vld [vmem:[%s5 + $0x10] sm:$0xff]
          %v873 = vld [vmem:[%s5 + $0x18] sm:$0xff]
          %v874 = vld [vmem:[%s5 + $0x20] sm:$0xff]
          %v875 = vld [vmem:[%s5 + $0x28] sm:$0xff]
          %v876 = vld [vmem:[%s5 + $0x30] sm:$0xff]
          %v877 = vld [vmem:[%s5 + $0x38] sm:$0xff]
          %v878 = vld [vmem:[%s5 + $0x40] sm:$0xff]
          %v879 = vld [vmem:[%s5 + $0x48] sm:$0xff]
          %v880 = vld [vmem:[%s5 + $0x50] sm:$0xff]
          %v881 = vld [vmem:[%s5 + $0x58] sm:$0xff]
          %v882 = vld [vmem:[%s5 + $0x60] sm:$0xff]
          %v883 = vld [vmem:[%s5 + $0x68] sm:$0xff]
          %v884 = vld [vmem:[%s5 + $0x70] sm:$0xff]
          %v885 = vld [vmem:[%s5 + $0x78] sm:$0xff]
          %v886 = vld [vmem:[%s6] sm:$0x1]
          %887 = vmatprep.subr.mxu0 0.0
          %888 = vmatpush1.msra.mxu0 %v885
          %889 = vmatprep.subr.mxu0 0.0
          %890 = vmatpush1.msra.mxu0 %v884
          %891 = vmatprep.subr.mxu0 0.0
          %892 = vmatpush1.msra.mxu0 %v883
          %893 = vmatprep.subr.mxu0 0.0
          %894 = vmatpush1.msra.mxu0 %v882
          %895 = vmatprep.subr.mxu0 0.0
          %896 = vmatpush1.msra.mxu0 %v881
          %897 = vmatprep.subr.mxu0 0.0
          %898 = vmatpush1.msra.mxu0 %v880
          %899 = vmatprep.subr.mxu0 0.0
          %900 = vmatpush1.msra.mxu0 %v879
          %901 = vmatprep.subr.mxu0 0.0
          %902 = vmatpush1.msra.mxu0 %v878
          %903 = vmatprep.subr.mxu0 0.0
          %904 = vmatpush1.msra.mxu0 %v877
          %905 = vmatprep.subr.mxu0 0.0
          %906 = vmatpush1.msra.mxu0 %v876
          %907 = vmatprep.subr.mxu0 0.0
          %908 = vmatpush1.msra.mxu0 %v875
          %909 = vmatprep.subr.mxu0 0.0
          %910 = vmatpush1.msra.mxu0 %v874
          %911 = vmatprep.subr.mxu0 0.0
          %912 = vmatpush1.msra.mxu0 %v873
          %913 = vmatprep.subr.mxu0 0.0
          %914 = vmatpush1.msra.mxu0 %v872
          %915 = vmatprep.subr.mxu0 0.0
          %916 = vmatpush1.msra.mxu0 %v871
          %917 = vmatprep.subr.mxu0 0.0
          %918 = vmatpush1.msra.mxu0 %v870
          %919 = vmatprep.subr.mxu0 0.0
          %920 = vmatpush2.msra.mxu0 0.0
          %921 = vmatprep.subr.mxu0 0.0
          %922 = vmatpush2.msra.mxu0 0.0
          %923 = vmatprep.subr.mxu0 0.0
          %924 = vmatpush2.msra.mxu0 0.0
          %925 = vmatprep.subr.mxu0 0.0
          %926 = vmatpush2.msra.mxu0 0.0
          %927 = vmatprep.subr.mxu0 0.0
          %928 = vmatpush2.msra.mxu0 0.0
          %929 = vmatprep.subr.mxu0 0.0
          %930 = vmatpush2.msra.mxu0 0.0
          %931 = vmatprep.subr.mxu0 0.0
          %932 = vmatpush2.msra.mxu0 0.0
          %933 = vmatprep.subr.mxu0 0.0
          %934 = vmatpush2.msra.mxu0 0.0
          %935 = vmatprep.subr.mxu0 0.0
          %936 = vmatpush2.msra.mxu0 0.0
          %937 = vmatprep.subr.mxu0 0.0
          %938 = vmatpush2.msra.mxu0 0.0
          %939 = vmatprep.subr.mxu0 0.0
          %940 = vmatpush2.msra.mxu0 0.0
          %941 = vmatprep.subr.mxu0 0.0
          %942 = vmatpush2.msra.mxu0 0.0
          %943 = vmatprep.subr.mxu0 0.0
          %944 = vmatpush2.msra.mxu0 0.0
          %945 = vmatprep.subr.mxu0 0.0
          %946 = vmatpush2.msra.mxu0 0.0
          %947 = vmatprep.subr.mxu0 0.0
          %948 = vmatpush2.msra.mxu0 0.0
          %949 = vmatprep.subr.mxu0 0.0
          %950 = vmatpush2.msra.mxu0 0.0
          %951 = vmatprep.mubr.f32.mxu0 0.0
          %952 = vmatmul.mubr.f32.gmra.mxu0 %v869
          %v953 = vpop.f32.mrf.mxu0
          %v954 = vadd.f32 %v886, %v953
          %v955 = vpop.f32.mrf.mxu0
          %956 = vdwg.mxu0
          %957 = vst [vmem:[%s330] sm:$0x1] %v954
        $region56: #{tpu_custom_call.1} parent=47 // pred_fallthru
          _
        %s958 = sand.u32 %s200, 1
        %s959 = scalar_lea.sflag [#allocation4], %s958
        %s960 = sand.u32 %s200, 1
        %s961 = scalar_lea.vmem [#allocation3], %s960
        %s962 = sand.u32 %s226, 1
        %s963 = scalar_lea.sflag [#allocation6], %s962
        %s964 = sand.u32 %s226, 1
        %s965 = scalar_lea.vmem [#allocation5], %s964
        // Predicated region
        $region57: #{tpu_custom_call.1} parent=47 // pred_check
          %p966 = pneg %p210
        $region58: #{tpu_custom_call.1} parent=47 // pred_check_branch
          %968 = sbr.rel (%p966) target = $region60
        $region59: #{tpu_custom_call.1} parent=47 // pred_region
          %s970 = ssub.s32 16, 16
          %971 = vsyncadd %s959, %s970
          %s972 = smul.addr %s30, 16
          %s973 = scalar_lea.hbm %s7, %s972
          %s975 = sshll.u32 %s961, 4
          %s976 = int_to_ptr.vmem [resolvable:$true] %s975
          %978 = dma.vmem_to_hbm [thread:$0]  %s976, 16, %s973, %s959
        $region60: #{tpu_custom_call.1} parent=47 // pred_fallthru
          _
        // Predicated region
        $region61: #{tpu_custom_call.1} parent=47 // pred_check
          %p979 = pneg %p236
        $region62: #{tpu_custom_call.1} parent=47 // pred_check_branch
          %981 = sbr.rel (%p979) target = $region64
        $region63: #{tpu_custom_call.1} parent=47 // pred_region
          %s983 = ssub.s32 16, 16
          %984 = vsyncadd %s963, %s983
          %s985 = smul.addr %s30, 16
          %s986 = scalar_lea.hbm %s8, %s985
          %s988 = sshll.u32 %s965, 4
          %s989 = int_to_ptr.vmem [resolvable:$true] %s988
          %991 = dma.vmem_to_hbm [thread:$0]  %s989, 16, %s986, %s963
        $region64: #{tpu_custom_call.1} parent=47 // pred_fallthru
          _
      $region48: #{tpu_custom_call.1} parent=5 // pred_fallthru
        _
      %p992 = scmp.le.s32.totalorder 2, %s21
      // Predicated region
      $region65: #{tpu_custom_call.1} parent=5 // pred_check
        %p993 = pneg %p992
      $region66: #{tpu_custom_call.1} parent=5 // pred_check_branch
        %995 = sbr.rel (%p993) target = $region68
      $region67: #{tpu_custom_call.1} parent=5 // pred_region
        %s996 = ssub.s32 %s21, 2
        // Predicated region
        $region69: #{tpu_custom_call.1} parent=67 // pred_check
          %p997 = pneg %p216
        $region70: #{tpu_custom_call.1} parent=67 // pred_check_branch
          %999 = sbr.rel (%p997) target = $region72
        $region71: #{tpu_custom_call.1} parent=67 // pred_region
          %s1000 = sand.u32 %s201, 1
          %s1001 = scalar_lea.sflag [#allocation4], %s1000
          %s1002 = sand.u32 %s201, 1
          %s1003 = scalar_lea.vmem [#allocation3], %s1002
          %1004 = dma.done %s1001, 16
        $region72: #{tpu_custom_call.1} parent=67 // pred_fallthru
          _
        // Predicated region
        $region73: #{tpu_custom_call.1} parent=67 // pred_check
          %p1005 = pneg %p242
        $region74: #{tpu_custom_call.1} parent=67 // pred_check_branch
          %1007 = sbr.rel (%p1005) target = $region76
        $region75: #{tpu_custom_call.1} parent=67 // pred_region
          %s1008 = sand.u32 %s227, 1
          %s1009 = scalar_lea.sflag [#allocation6], %s1008
          %s1010 = sand.u32 %s227, 1
          %s1011 = scalar_lea.vmem [#allocation5], %s1010
          %1012 = dma.done %s1009, 16
        $region76: #{tpu_custom_call.1} parent=67 // pred_fallthru
          _
      $region68: #{tpu_custom_call.1} parent=5 // pred_fallthru
        _
    $region6: #{tpu_custom_call.1} parent=1 // loop_footer
      %s25 = sadd.s32 1, %s21
    $region7: #{tpu_custom_call.1} parent=1 // loop_footer_branch
      %20 = sbr.rel target = $region3
    $region8: #{tpu_custom_call.1} parent=1 // loop_exit
      _
    %1013 = vsyncpa [#allocation4], 1
    %s1014 = scalar_lea.sflag [#allocation4], 1
    %1015 = vsyncpa %s1014, 1
    %1016 = vsyncpa [#allocation6], 1
    %s1017 = scalar_lea.sflag [#allocation6], 1
    %1018 = vsyncpa %s1017, 1

</llo_original>
